<compile_context>
chip_gen: v5e
topology: v5e:2x2
jax: 0.10.0
libtpu: 0.0.40
codegen_flags: <defaults>
</compile_context>

<pallas_src>
import jax
import jax.numpy as jnp
from jax.experimental import pallas as pl
from jax.experimental.pallas import tpu as pltpu


def _round_up(x, m):
    return ((x + m - 1) // m) * m


def _cdiv(a, b):
    return -(-a // b)


def _proj_kernel(x_ref, w_ref, b_ref, o_ref):
    # x_ref: (TM, K) patch vectors (bf16), w_ref: (K, Ep) projection (bf16),
    # b_ref: (1, Ep) bias (f32).  MXU matmul with f32 accumulation, f32 bias add.
    acc = jnp.dot(x_ref[...], w_ref[...], preferred_element_type=jnp.float32)
    o_ref[...] = (acc + b_ref[...]).astype(o_ref.dtype)


def patch_embed_forward(x, weight, bias, patch_size, *, tm=512,
                        compute_dtype=jnp.bfloat16):
    """PatchEmbed forward.

    x:      (B, C, H, W)      (NCHW, same as PyTorch)
    weight: (E, C, ph, pw)    (PyTorch Conv2d weight layout)
    bias:   (E,)
    returns (B, num_patches, E) in x.dtype
    """
    B, C, H, W = x.shape
    E = weight.shape[0]
    ph, pw = patch_size
    assert H % ph == 0 and W % pw == 0
    gh, gw = H // ph, W // pw
    num_patches = gh * gw
    K = C * ph * pw
    M = B * num_patches
    out_dtype = x.dtype

    # Lane-dense output: pad embed dim to a multiple of 128 (unmasked vst).
    # (v6e/v7x note: 256-alignment would fully fill the 256-wide MXU, but this op
    #  is HBM-bound, so we keep 128 to avoid extra output traffic for small E.)
    Ep = _round_up(E, 128)

    # M tile: dtype-aware sublane rounding (bf16 packs 2 rows / sublane).
    sub = 16 if jnp.dtype(compute_dtype).itemsize == 2 else 8
    if M <= tm:
        TM = M                                   # full extent -> always legal
    else:
        TM = _round_up(min(tm, M), sub)
        # v7x megacore: prefer an even grid-step count for a balanced 2-TC split.
        steps = _cdiv(M, TM)
        if steps > 1 and steps % 2 == 1:
            TM = _round_up(_cdiv(M, steps + 1), sub)
    grid_m = _cdiv(M, TM)                        # masked tail block if TM ∤ M

    # --- glue: patchify (one standalone XLA transpose; no compute) ----------
    # (B, C, gh, ph, gw, pw) -> (B, gh, gw, C, ph, pw) -> (M, K), cast to bf16 so
    # the materialized buffer (and the kernel's dominant HBM read) is half-size.
    xp = x.astype(compute_dtype).reshape(B, C, gh, ph, gw, pw)
    xp = jnp.transpose(xp, (0, 2, 4, 1, 3, 5)).reshape(M, K)

    # Conv weight (E, C, ph, pw) -> (K, E): reduction order (c, kh, kw) matches
    # the patch-vector order above.  Pad E -> Ep with zero columns.
    w_mat = weight.reshape(E, K).T.astype(compute_dtype)
    b_mat = bias.reshape(1, E).astype(jnp.float32)      # bias add stays in f32
    if Ep != E:
        w_mat = jnp.pad(w_mat, ((0, 0), (0, Ep - E)))
        b_mat = jnp.pad(b_mat, ((0, 0), (0, Ep - E)))

    in_itemsize = jnp.dtype(compute_dtype).itemsize
    out_itemsize = jnp.dtype(out_dtype).itemsize

    # Single-buffer the resident weight/bias when the weight is large enough for
    # the VMEM savings to matter (v7x: 64 MiB/TC).  Constant index_map -> the
    # block is only DMA'd once either way.
    resident_kwargs = {}
    if K * Ep * in_itemsize >= (4 << 20):
        resident_kwargs = dict(pipeline_mode=pl.Buffered(1))

    # double-buffered x & out tiles + resident weight/bias, with 2x headroom,
    # capped below v7x's physical 64 MiB per-TC VMEM.
    vmem_budget = (2 * TM * K * in_itemsize + 2 * TM * Ep * out_itemsize
                   + K * Ep * in_itemsize + Ep * 4)
    vmem_limit = int(min(48 * 1024 * 1024, max(16 * 1024 * 1024, 2 * vmem_budget)))

    out = pl.pallas_call(
        _proj_kernel,
        out_shape=jax.ShapeDtypeStruct((M, Ep), out_dtype),
        grid=(grid_m,),
        in_specs=[
            pl.BlockSpec((TM, K), lambda i: (i, 0)),               # K un-tiled
            pl.BlockSpec((K, Ep), lambda i: (0, 0), **resident_kwargs),
            pl.BlockSpec((1, Ep), lambda i: (0, 0), **resident_kwargs),
        ],
        out_specs=pl.BlockSpec((TM, Ep), lambda i: (i, 0)),
        compiler_params=pltpu.CompilerParams(
            dimension_semantics=("parallel",),   # megacore sharding on v7x
            vmem_limit_bytes=vmem_limit,
        ),
        cost_estimate=pl.CostEstimate(
            flops=2 * M * K * Ep,
            bytes_accessed=in_itemsize * (M * K + K * Ep) + 4 * Ep
                           + out_itemsize * M * Ep,
            transcendentals=0,
        ),
    )(xp, w_mat, b_mat)

    # TODO(synk): if K = C*ph*pw grows beyond a few thousand, add a trailing
    # "arbitrary" K grid axis with a VMEM f32 accumulator + pl.when init/finalize.
    if Ep != E:
        out = out[:, :E]                          # no-op for typical E (e.g. 768)
    return out.reshape(B, num_patches, E)


if __name__ == "__main__":
    # Small shapes consistent with the module: img_size=16, patch_size=4,
    # in_c=4, embed_dim=32 -> num_patches = (16/4)^2 = 16.
    B, C, H, W = 2, 4, 16, 16
    ph = pw = 4
    E = 32

    key = jax.random.PRNGKey(0)
    kx, kw, kb = jax.random.split(key, 3)
    x = jax.random.normal(kx, (B, C, H, W), dtype=jnp.float32)
    weight = jax.random.normal(kw, (E, C, ph, pw), dtype=jnp.float32) * 0.02
    bias = jax.random.normal(kb, (E,), dtype=jnp.float32) * 0.02

    out = patch_embed_forward(x, weight, bias, (ph, pw))
    out = jax.block_until_ready(out)

    # Pure-JAX reference: conv2d(stride=patch) -> flatten(2) -> transpose(1, 2)
    ref_conv = jax.lax.conv_general_dilated(
        x, weight, window_strides=(ph, pw), padding="VALID",
        dimension_numbers=("NCHW", "OIHW", "NCHW"),
    ) + bias.reshape(1, E, 1, 1)
    ref = jnp.transpose(ref_conv.reshape(B, E, -1), (0, 2, 1))

    assert out.shape == (B, (H // ph) * (W // pw), E), out.shape
    # bf16 matmul inputs with f32 accumulation vs f32 conv reference.
    err = float(jnp.max(jnp.abs(out - ref)))
    assert jnp.allclose(out, ref, atol=1e-2, rtol=5e-2), err
    print("KERNEL_OK")
</pallas_src>

<mosaic_0001>
module attributes {stable_mosaic.version = 11 : i64} {
  func.func @_proj_kernel(%arg0: i32, %arg1: memref<32x64xbf16, #tpu.memory_space<vmem>>, %arg2: memref<64x128xbf16, #tpu.memory_space<vmem>>, %arg3: memref<1x128xf32, #tpu.memory_space<vmem>>, %arg4: memref<32x128xf32, #tpu.memory_space<vmem>>) attributes {dimension_semantics = [#tpu.dimension_semantics<parallel>], iteration_bounds = array<i64: 1>, scalar_prefetch = 0 : i64, scratch_operands = 0 : i64, tpu.core_type = #tpu.core_type<tc>, window_params = [{transform_indices = @transform_0, window_bounds = array<i64: 32, 64>}, {pipeline_mode = #tpu.pipeline_mode<synchronous>, transform_indices = @transform_1, window_bounds = array<i64: 64, 128>}, {pipeline_mode = #tpu.pipeline_mode<synchronous>, transform_indices = @transform_2, window_bounds = array<i64: 1, 128>}, {transform_indices = @transform_3, window_bounds = array<i64: 32, 128>}]} {
    %c0 = arith.constant 0 : index
    %c0_0 = arith.constant 0 : index
    %0 = vector.load %arg1[%c0, %c0_0] : memref<32x64xbf16, #tpu.memory_space<vmem>>, vector<32x64xbf16>
    %c0_1 = arith.constant 0 : index
    %c0_2 = arith.constant 0 : index
    %1 = vector.load %arg2[%c0_1, %c0_2] : memref<64x128xbf16, #tpu.memory_space<vmem>>, vector<64x128xbf16>
    %cst = arith.constant dense<0.000000e+00> : vector<32x128xf32>
    %2 = tpu.matmul %0, %1, %cst {dimension_numbers = #tpu.dot_dimension_numbers<[1], [0], [0], [1], [0, 0, 1, 1], [], []>} : vector<32x64xbf16>, vector<64x128xbf16>, vector<32x128xf32> -> vector<32x128xf32>
    %c0_3 = arith.constant 0 : index
    %c0_4 = arith.constant 0 : index
    %3 = vector.load %arg3[%c0_3, %c0_4] : memref<1x128xf32, #tpu.memory_space<vmem>>, vector<1x128xf32>
    %4 = vector.broadcast %3 : vector<1x128xf32> to vector<32x128xf32>
    %5 = arith.addf %2, %4 : vector<32x128xf32>
    %c0_5 = arith.constant 0 : index
    %c0_6 = arith.constant 0 : index
    %6 = vector.load %arg4[%c0_5, %c0_6] : memref<32x128xf32, #tpu.memory_space<vmem>>, vector<32x128xf32>
    tpu.vector_store %arg4[%c0_5, %c0_6], %5 {strides = array<i32>} : memref<32x128xf32, #tpu.memory_space<vmem>>, vector<32x128xf32>,
    return
  }
  func.func @transform_0(%arg0: i32) -> (i32, i32) {
    %c0_i32 = arith.constant 0 : i32
    %c0_i32_0 = arith.constant 0 : i32
    return %arg0, %c0_i32 : i32, i32
  }
  func.func @transform_1(%arg0: i32) -> (i32, i32) {
    %c0_i32 = arith.constant 0 : i32
    %c0_i32_0 = arith.constant 0 : i32
    %c0_i32_1 = arith.constant 0 : i32
    return %c0_i32, %c0_i32_0 : i32, i32
  }
  func.func @transform_2(%arg0: i32) -> (i32, i32) {
    %c0_i32 = arith.constant 0 : i32
    %c0_i32_0 = arith.constant 0 : i32
    %c0_i32_1 = arith.constant 0 : i32
    return %c0_i32, %c0_i32_0 : i32, i32
  }
  func.func @transform_3(%arg0: i32) -> (i32, i32) {
    %c0_i32 = arith.constant 0 : i32
    %c0_i32_0 = arith.constant 0 : i32
    return %arg0, %c0_i32 : i32, i32
  }
}

</mosaic_0001>

<llo_original>
// kernel: tpu_custom_call.1
$region0: #{tpu_custom_call.1}
  #allocation0 [shape = 'u32[]', space=smem, size = 0x4, offset = 0x4, fixed_abs, tag = 'smem constant byte address 0x4 - core index']
  #allocation1 [shape = 'u32[72,128]{1,0:T(1,128)}', space=vmem, size = 0x9000, scoped, tag = 'internal scratch']
  %s0 = inlined_call_operand.hbm [shape: bf16[32,64], index: 0, kind: input, shape index: {}]
  %s1 = inlined_call_operand.hbm [shape: bf16[64,128], index: 1, kind: input, shape index: {}]
  %s2 = inlined_call_operand.vmem [shape: f32[1,128], index: 2, kind: input, shape index: {}]
  %s3 = inlined_call_operand.hbm [shape: f32[32,128], index: 3, kind: output, shape index: {}]
  %s4 = sld [smem:[#allocation0]]
  $region30: #{tpu_custom_call.1} parent=0
    _
  %s6 = ssub.s32 1, %s4
  %s7 = scalar_select 0, %s6, %s4
  $region1: #{tpu_custom_call.1} parent=0
    #allocation2 [shape = 'u8[8192]{0}', space=vmem, size = 0x2000, scoped, tag = 'input window, operand 0, single buffered']
    #allocation3 [shape = 's32[1]{0}', space=sflag, size = 0x4, scoped, tag = 'scoped memory for tpu_custom_call.1']
    #allocation4 [shape = 's32[1]{0}', space=sflag, size = 0x4, scoped, tag = 'scoped memory for tpu_custom_call.1']
    #allocation5 [shape = 'u8[16384]{0}', space=vmem, size = 0x4000, scoped, tag = 'input window, operand 1, single buffered']
    #allocation6 [shape = 's32[1]{0}', space=sflag, size = 0x4, scoped, tag = 'scoped memory for tpu_custom_call.1']
    #allocation7 [shape = 'u8[16384]{0}', space=vmem, size = 0x4000, scoped, tag = 'output window, operand 0, single buffered']
    %8 = vsyncpa [#allocation3], 0
    %9 = vsyncpa [#allocation6], 0
    %10 = vsyncpa [#allocation4], 0
    // Predicated region
    $region2: #{tpu_custom_call.1} parent=1 // pred_check
      _
    $region3: #{tpu_custom_call.1} parent=1 // pred_check_branch
      %12 = sbr.rel (0) target = $region5
    $region4: #{tpu_custom_call.1} parent=1 // pred_region
      %14 = vsyncadd [#allocation3], 0
      %s15 = sshll.u32 %s0, 4
      %s16 = int_to_ptr.hbm [resolvable:$true] %s15
      %s17 = sshll.u32 [#allocation2], 4
      %s18 = int_to_ptr.vmem [resolvable:$true] %s17
      %23 = dma.hbm_to_vmem [thread:$0]  %s16, 256, %s18, [#allocation3], 64, 64, 4
    $region5: #{tpu_custom_call.1} parent=1 // pred_fallthru
      _
    // Predicated region
    $region6: #{tpu_custom_call.1} parent=1 // pred_check
      _
    $region7: #{tpu_custom_call.1} parent=1 // pred_check_branch
      %25 = sbr.rel (0) target = $region9
    $region8: #{tpu_custom_call.1} parent=1 // pred_region
      %27 = vsyncadd [#allocation6], 0
      %s28 = sshll.u32 %s1, 4
      %s29 = int_to_ptr.hbm [resolvable:$true] %s28
      %s30 = sshll.u32 [#allocation5], 4
      %s31 = int_to_ptr.vmem [resolvable:$true] %s30
      %36 = dma.hbm_to_vmem [thread:$0]  %s29, 512, %s31, [#allocation6], 64, 64, 4
    $region9: #{tpu_custom_call.1} parent=1 // pred_fallthru
      _
    // Predicated region
    $region10: #{tpu_custom_call.1} parent=1 // pred_check
      _
    $region11: #{tpu_custom_call.1} parent=1 // pred_check_branch
      %38 = sbr.rel (0) target = $region13
    $region12: #{tpu_custom_call.1} parent=1 // pred_region
      _
    $region13: #{tpu_custom_call.1} parent=1 // pred_fallthru
      _
    // Predicated region
    $region14: #{tpu_custom_call.1} parent=1 // pred_check
      _
    $region15: #{tpu_custom_call.1} parent=1 // pred_check_branch
      %40 = sbr.rel (0) target = $region17
    $region16: #{tpu_custom_call.1} parent=1 // pred_region
      %42 = dma.done [#allocation3], 256
    $region17: #{tpu_custom_call.1} parent=1 // pred_fallthru
      _
    // Predicated region
    $region18: #{tpu_custom_call.1} parent=1 // pred_check
      _
    $region19: #{tpu_custom_call.1} parent=1 // pred_check_branch
      %44 = sbr.rel (0) target = $region21
    $region20: #{tpu_custom_call.1} parent=1 // pred_region
      %46 = dma.done [#allocation6], 512
    $region21: #{tpu_custom_call.1} parent=1 // pred_fallthru
      _
    %v48 = vld [vmem:[#allocation2] sm:$0xf]
    %v49 = vld [vmem:[#allocation2 + $0x4] sm:$0xf]
    %v50 = vld [vmem:[#allocation2 + $0x8] sm:$0xf]
    %v51 = vld [vmem:[#allocation2 + $0xc] sm:$0xf]
    %v52 = vld [vmem:[#allocation5] sm:$0xf]
    %v53 = vld [vmem:[#allocation5 + $0x4] sm:$0xf]
    %v54 = vld [vmem:[#allocation5 + $0x8] sm:$0xf]
    %v55 = vld [vmem:[#allocation5 + $0xc] sm:$0xf]
    %v56 = vld [vmem:[#allocation5 + $0x10] sm:$0xf]
    %v57 = vld [vmem:[#allocation5 + $0x14] sm:$0xf]
    %v58 = vld [vmem:[#allocation5 + $0x18] sm:$0xf]
    %v59 = vld [vmem:[#allocation5 + $0x1c] sm:$0xf]
    %v60 = vld [vmem:[%s2] sm:$0x1]
    %v62 = vperm.slane %v60, 0
    %v68 = vunpack.c.l.b16 %v48
    %v69 = vunpack.c.l.b16 %v49
    %v70 = vunpack.c.l.b16 %v50
    %v71 = vunpack.c.l.b16 %v51
    %v72 = vpack.c.b16 %v69, %v68
    %v73 = vpack.c.b16 %v71, %v70
    %v82 = vunpack.c.l.b16 %v52
    %v83 = vunpack.c.l.b16 %v53
    %v84 = vunpack.c.l.b16 %v54
    %v85 = vunpack.c.l.b16 %v55
    %v86 = vunpack.c.l.b16 %v56
    %v87 = vunpack.c.l.b16 %v57
    %v88 = vunpack.c.l.b16 %v58
    %v89 = vunpack.c.l.b16 %v59
    %v90 = vpack.c.b16 %v83, %v82
    %v91 = vpack.c.b16 %v85, %v84
    %v92 = vpack.c.b16 %v87, %v86
    %v93 = vpack.c.b16 %v89, %v88
    %vm98 = vcmask 523264
    %v100 = vsel %vm98, %v72, 0
    %v103 = vsel %vm98, %v73, 0
    %105 = vmatpush.bf16.msra.mxu0 0
    %106 = vmatpush.bf16.msra.mxu0 0
    %107 = vmatpush.bf16.msra.mxu0 0
    %108 = vmatpush.bf16.msra.mxu0 0
    %109 = vmatpush.bf16.msra.mxu0 %v93
    %110 = vmatpush.bf16.msra.mxu0 %v92
    %111 = vmatpush.bf16.msra.mxu0 %v91
    %112 = vmatpush.bf16.msra.mxu0 %v90
    %113 = vmatmul.bf16.gmra.mxu0 %v100
    %v114 = vpop.f32.mrf.mxu0
    %v115 = vadd.f32 %v62, %v114
    %v116 = vpop.f32.mrf.mxu0
    %v117 = vadd.f32 %v62, %v116
    %118 = vmatmul.bf16.gmra.mxu0 %v103
    %v119 = vpop.f32.mrf.mxu0
    %v120 = vadd.f32 %v62, %v119
    %v121 = vpop.f32.mrf.mxu0
    %v122 = vadd.f32 %v62, %v121
    %123 = vdwg.mxu0
    %124 = vst [vmem:[#allocation7] sm:$0xff] %v115
    %125 = vst [vmem:[#allocation7 + $0x8] sm:$0xff] %v117
    %126 = vst [vmem:[#allocation7 + $0x10] sm:$0xff] %v120
    %127 = vst [vmem:[#allocation7 + $0x18] sm:$0xff] %v122
    // Predicated region
    $region22: #{tpu_custom_call.1} parent=1 // pred_check
      _
    $region23: #{tpu_custom_call.1} parent=1 // pred_check_branch
      %129 = sbr.rel (0) target = $region25
    $region24: #{tpu_custom_call.1} parent=1 // pred_region
      %131 = vsyncadd [#allocation4], 0
      %s132 = sshll.u32 [#allocation7], 4
      %s133 = int_to_ptr.vmem [resolvable:$true] %s132
      %s134 = sshll.u32 %s3, 4
      %s135 = int_to_ptr.hbm [resolvable:$true] %s134
      %140 = dma.vmem_to_hbm [thread:$0]  %s133, 512, %s135, [#allocation4], 128, 128, 8
    $region25: #{tpu_custom_call.1} parent=1 // pred_fallthru
      _
    // Predicated region
    $region26: #{tpu_custom_call.1} parent=1 // pred_check
      _
    $region27: #{tpu_custom_call.1} parent=1 // pred_check_branch
      %142 = sbr.rel (0) target = $region29
    $region28: #{tpu_custom_call.1} parent=1 // pred_region
      %144 = dma.done [#allocation4], 512
    $region29: #{tpu_custom_call.1} parent=1 // pred_fallthru
      _
    %145 = vsyncpa [#allocation3], 1
    %146 = vsyncpa [#allocation6], 1
    %147 = vsyncpa [#allocation4], 1

</llo_original>
